<compile_context>
chip_gen: v5e
topology: v5e:2x2
jax: 0.10.0
libtpu: 0.0.40
codegen_flags: <defaults>
</compile_context>

<pallas_src>
import jax
import jax.numpy as jnp
from jax import lax
from jax.experimental import pallas as pl
from jax.experimental.pallas import tpu as pltpu


def _round_up(v: int, m: int) -> int:
    return (v + m - 1) // m * m


_SUBLANE_PAD = 16   # bf16 sublane-packing multiple (rows)
_LANE_PAD = 128     # lane-dense feature dim


# ----------------------------- Pallas kernel --------------------------------

def fused_stage_kernel(a_ref, x_ref, w_ref, b_ref, out_ref):
    """All L GNN layers + final l2norm fused in a single kernel.

      a_ref  : [Np, Np]    bf16  sym-normalized adjacency (zero padded)
      x_ref  : [Np, Dp]    f32   node features (zero padded); aliased with out
      w_ref  : [L, Dp, Dp] bf16  stacked layer weights
      b_ref  : [L, 1, Dp]  f32   stacked layer biases
      out_ref: [Np, Dp]    f32
    """
    a = a_ref[...]                       # load adjacency once for all layers
    num_layers = w_ref.shape[0]

    def layer(l, carry):
        x_f32, x_bf16 = carry
        # Message passing + linear transform on the MXU: bf16 in, f32 accumulate.
        agg = jnp.dot(a, x_bf16, preferred_element_type=jnp.float32)
        h = jnp.dot(agg.astype(jnp.bfloat16), w_ref[l],
                    preferred_element_type=jnp.float32)
        h = h + b_ref[l]                 # bias broadcast once per layer (f32 VPU)
        h = jnp.maximum(h, 0.0)          # ReLU (f32 VPU)
        x_new = h + x_f32                # skipconnect InputChoice candidate 1
        # Carry the bf16 pack alongside so it is produced once per layer and the
        # next layer's first matmul does not re-pack inside its dependency chain.
        return (x_new, x_new.astype(jnp.bfloat16))

    x0 = x_ref[...]
    x, _ = lax.fori_loop(0, num_layers, layer,
                         (x0, x0.astype(jnp.bfloat16)), unroll=True)

    # F.normalize(x, p=2, dim=-1) == x * rsqrt(max(sum(x^2), eps^2)); rsqrt -> EUP.
    # Padded feature columns are exactly zero, so the norm over Dp equals the
    # norm over d.  Fully-padded rows (if any) hit ss=0 -> clamp -> output 0.
    ss = jnp.sum(x * x, axis=-1, keepdims=True)
    out_ref[...] = (x * lax.rsqrt(jnp.maximum(ss, 1e-24))).astype(out_ref.dtype)


# ------------------------------ JAX wrappers ---------------------------------

def prepare_params(w_stack, b_stack):
    """Pad/cast the static layer parameters ONCE (outside the per-step forward).

      w_stack: [L, D, D] f32  ->  [L, Dp, Dp] bf16
      b_stack: [L, 1, D] f32  ->  [L, 1, Dp]  f32
    """
    _, d, _ = w_stack.shape
    d_pad = _round_up(d, _LANE_PAD)
    w_pad = jnp.pad(w_stack, ((0, 0), (0, d_pad - d), (0, d_pad - d))).astype(jnp.bfloat16)
    b_pad = jnp.pad(b_stack, ((0, 0), (0, 0), (0, d_pad - d))).astype(jnp.float32)
    return w_pad, b_pad


def gnn_stage_fused(a_pad, x_pad, w_pad, b_pad):
    """One pallas_call for the whole stage on already-padded operands."""
    vmem = pl.BlockSpec(memory_space=pltpu.MemorySpace.VMEM)
    return pl.pallas_call(
        fused_stage_kernel,
        out_shape=jax.ShapeDtypeStruct(x_pad.shape, jnp.float32),
        in_specs=[vmem, vmem, vmem, vmem],
        out_specs=vmem,
        input_output_aliases={1: 0},      # reuse padded-x HBM buffer as the output
    )(a_pad, x_pad, w_pad, b_pad)


def build_normalized_adjacency(edge_index, num_nodes):
    """Dense sym-normalized adjacency with self-loops (glue, plain JAX)."""
    src, dst = edge_index[0], edge_index[1]
    a = jnp.zeros((num_nodes, num_nodes), jnp.float32)
    # TODO(synk): .at[].set dedups multi-edges; a PyG GCNConv would count repeats.
    a = a.at[src, dst].set(1.0)
    a = jnp.maximum(a, a.T)                                       # undirected
    a = jnp.maximum(a, jnp.eye(num_nodes, dtype=jnp.float32))     # self-loops
    deg = jnp.sum(a, axis=-1)
    d_inv_sqrt = lax.rsqrt(jnp.maximum(deg, 1.0))
    return d_inv_sqrt[:, None] * a * d_inv_sqrt[None, :]


@jax.jit
def forward(x, edge_index, w_pad, b_pad, edge_attr=None, batch=None):
    """FeatureEncoder (passthrough, encoders disabled) + fused GNN stage.

    Returns the node features in the padded [Np, Dp] layout so downstream
    stages can stay lane-dense; slice [:n, :d] once at the very end of the
    network (done by the caller).
    """
    n, d = x.shape
    n_pad = _round_up(n, _SUBLANE_PAD)    # rows: sublane-pack multiple only
    d_pad = w_pad.shape[-1]               # lanes: already padded to 128 in params

    a_hat = build_normalized_adjacency(edge_index, n)
    a_pad = jnp.pad(a_hat, ((0, n_pad - n), (0, n_pad - n))).astype(jnp.bfloat16)
    x_pad = jnp.pad(x, ((0, n_pad - n), (0, d_pad - d))).astype(jnp.float32)

    x_pad = gnn_stage_fused(a_pad, x_pad, w_pad, b_pad)
    # TODO(synk): 'layers_mp' InputChoice not in space_dict -> selective_layers skipped.
    return x_pad, edge_index, edge_attr, batch


# --------------------------- pure-JAX reference ------------------------------

def reference_forward(x, edge_index, w_stack, b_stack):
    a_hat = build_normalized_adjacency(edge_index, x.shape[0]).astype(jnp.bfloat16)
    h = x.astype(jnp.float32)
    for l in range(w_stack.shape[0]):
        agg = jnp.dot(a_hat, h.astype(jnp.bfloat16),
                      preferred_element_type=jnp.float32)
        z = jnp.dot(agg.astype(jnp.bfloat16), w_stack[l].astype(jnp.bfloat16),
                    preferred_element_type=jnp.float32) + b_stack[l]
        h = jnp.maximum(z, 0.0) + h
    nrm = jnp.sqrt(jnp.sum(h * h, axis=-1, keepdims=True))
    return h / jnp.maximum(nrm, 1e-12)


# --------------------------------- main ---------------------------------------

if __name__ == "__main__":
    key = jax.random.PRNGKey(0)
    N, D, E, num_layers = 16, 32, 40, 3   # dim_in == dim_out (required by residual)

    k_x, k_e, *k_w = jax.random.split(key, 2 + 2 * num_layers)

    x = jax.random.normal(k_x, (N, D), dtype=jnp.float32)
    edge_index = jax.random.randint(k_e, (2, E), 0, N, dtype=jnp.int32)

    # Deterministic parameter init, shapes from GNNLayer(dim_in=D, dim_out=D).
    weights, biases = [], []
    for i in range(num_layers):
        w = jax.random.normal(k_w[2 * i], (D, D), dtype=jnp.float32) / jnp.sqrt(D)
        b = jax.random.normal(k_w[2 * i + 1], (1, D), dtype=jnp.float32) * 0.01
        weights.append(w)
        biases.append(b)
    w_stack = jnp.stack(weights)          # [L, D, D]
    b_stack = jnp.stack(biases)           # [L, 1, D]

    # Static parameter prep happens exactly once, outside the forward path.
    w_pad, b_pad = prepare_params(w_stack, b_stack)

    out_pad, out_ei, out_ea, out_b = forward(x, edge_index, w_pad, b_pad)
    out_pad = jax.block_until_ready(out_pad)

    # Single slice back to logical shape at the very end of the network.
    out_x = out_pad[:N, :D]

    # Correctness: finite, unit-norm rows after l2norm, close to pure-JAX reference.
    ref = reference_forward(x, edge_index, w_stack, b_stack)
    assert out_x.shape == (N, D)
    assert bool(jnp.all(jnp.isfinite(out_x)))
    assert bool(jnp.allclose(jnp.linalg.norm(out_x, axis=-1), 1.0, atol=1e-3))
    assert bool(jnp.allclose(out_x, ref, atol=2e-2, rtol=2e-2))

    print("KERNEL_OK")
</pallas_src>

<mosaic_0001>
module attributes {stable_mosaic.version = 11 : i64} {
  func.func @fused_stage_kernel(%arg0: memref<16x16xbf16, #tpu.memory_space<vmem>>, %arg1: memref<16x128xf32, #tpu.memory_space<vmem>>, %arg2: memref<3x128x128xbf16, #tpu.memory_space<vmem>>, %arg3: memref<3x1x128xf32, #tpu.memory_space<vmem>>, %arg4: memref<16x128xf32, #tpu.memory_space<vmem>>) attributes {dimension_semantics = [], scalar_prefetch = 0 : i64, scratch_operands = 0 : i64, tpu.core_type = #tpu.core_type<tc>} {
    %c0 = arith.constant 0 : index
    %c0_0 = arith.constant 0 : index
    %0 = vector.load %arg0[%c0, %c0_0] : memref<16x16xbf16, #tpu.memory_space<vmem>>, vector<16x16xbf16>
    %c0_1 = arith.constant 0 : index
    %c0_2 = arith.constant 0 : index
    %1 = vector.load %arg1[%c0_1, %c0_2] : memref<16x128xf32, #tpu.memory_space<vmem>>, vector<16x128xf32>
    %2 = arith.truncf %1 : vector<16x128xf32> to vector<16x128xbf16>
    %c0_i32 = arith.constant 0 : i32
    %cst = arith.constant dense<0.000000e+00> : vector<16x128xf32>
    %3 = tpu.matmul %0, %2, %cst {dimension_numbers = #tpu.dot_dimension_numbers<[1], [0], [0], [1], [0, 0, 1, 1], [], []>} : vector<16x16xbf16>, vector<16x128xbf16>, vector<16x128xf32> -> vector<16x128xf32>
    %4 = arith.truncf %3 : vector<16x128xf32> to vector<16x128xbf16>
    %5 = arith.index_cast %c0_i32 : i32 to index
    %c0_3 = arith.constant 0 : index
    %c0_4 = arith.constant 0 : index
    %6 = vector.load %arg2[%5, %c0_3, %c0_4] : memref<3x128x128xbf16, #tpu.memory_space<vmem>>, vector<1x128x128xbf16>
    %7 = vector.shape_cast %6 : vector<1x128x128xbf16> to vector<128x128xbf16>
    %cst_5 = arith.constant dense<0.000000e+00> : vector<16x128xf32>
    %8 = tpu.matmul %4, %7, %cst_5 {dimension_numbers = #tpu.dot_dimension_numbers<[1], [0], [0], [1], [0, 0, 1, 1], [], []>} : vector<16x128xbf16>, vector<128x128xbf16>, vector<16x128xf32> -> vector<16x128xf32>
    %9 = arith.index_cast %c0_i32 : i32 to index
    %c0_6 = arith.constant 0 : index
    %c0_7 = arith.constant 0 : index
    %10 = vector.load %arg3[%9, %c0_6, %c0_7] : memref<3x1x128xf32, #tpu.memory_space<vmem>>, vector<1x1x128xf32>
    %11 = vector.shape_cast %10 : vector<1x1x128xf32> to vector<1x128xf32>
    %12 = vector.broadcast %11 : vector<1x128xf32> to vector<16x128xf32>
    %13 = arith.addf %8, %12 : vector<16x128xf32>
    %cst_8 = arith.constant 0.000000e+00 : f32
    %14 = vector.broadcast %cst_8 : f32 to vector<16x128xf32>
    %15 = arith.maximumf %13, %14 : vector<16x128xf32>
    %16 = arith.addf %15, %1 : vector<16x128xf32>
    %17 = arith.truncf %16 : vector<16x128xf32> to vector<16x128xbf16>
    %c1_i32 = arith.constant 1 : i32
    %cst_9 = arith.constant dense<0.000000e+00> : vector<16x128xf32>
    %18 = tpu.matmul %0, %17, %cst_9 {dimension_numbers = #tpu.dot_dimension_numbers<[1], [0], [0], [1], [0, 0, 1, 1], [], []>} : vector<16x16xbf16>, vector<16x128xbf16>, vector<16x128xf32> -> vector<16x128xf32>
    %19 = arith.truncf %18 : vector<16x128xf32> to vector<16x128xbf16>
    %20 = arith.index_cast %c1_i32 : i32 to index
    %c0_10 = arith.constant 0 : index
    %c0_11 = arith.constant 0 : index
    %21 = vector.load %arg2[%20, %c0_10, %c0_11] : memref<3x128x128xbf16, #tpu.memory_space<vmem>>, vector<1x128x128xbf16>
    %22 = vector.shape_cast %21 : vector<1x128x128xbf16> to vector<128x128xbf16>
    %cst_12 = arith.constant dense<0.000000e+00> : vector<16x128xf32>
    %23 = tpu.matmul %19, %22, %cst_12 {dimension_numbers = #tpu.dot_dimension_numbers<[1], [0], [0], [1], [0, 0, 1, 1], [], []>} : vector<16x128xbf16>, vector<128x128xbf16>, vector<16x128xf32> -> vector<16x128xf32>
    %24 = arith.index_cast %c1_i32 : i32 to index
    %c0_13 = arith.constant 0 : index
    %c0_14 = arith.constant 0 : index
    %25 = vector.load %arg3[%24, %c0_13, %c0_14] : memref<3x1x128xf32, #tpu.memory_space<vmem>>, vector<1x1x128xf32>
    %26 = vector.shape_cast %25 : vector<1x1x128xf32> to vector<1x128xf32>
    %27 = vector.broadcast %26 : vector<1x128xf32> to vector<16x128xf32>
    %28 = arith.addf %23, %27 : vector<16x128xf32>
    %cst_15 = arith.constant 0.000000e+00 : f32
    %29 = vector.broadcast %cst_15 : f32 to vector<16x128xf32>
    %30 = arith.maximumf %28, %29 : vector<16x128xf32>
    %31 = arith.addf %30, %16 : vector<16x128xf32>
    %32 = arith.truncf %31 : vector<16x128xf32> to vector<16x128xbf16>
    %c2_i32 = arith.constant 2 : i32
    %cst_16 = arith.constant dense<0.000000e+00> : vector<16x128xf32>
    %33 = tpu.matmul %0, %32, %cst_16 {dimension_numbers = #tpu.dot_dimension_numbers<[1], [0], [0], [1], [0, 0, 1, 1], [], []>} : vector<16x16xbf16>, vector<16x128xbf16>, vector<16x128xf32> -> vector<16x128xf32>
    %34 = arith.truncf %33 : vector<16x128xf32> to vector<16x128xbf16>
    %35 = arith.index_cast %c2_i32 : i32 to index
    %c0_17 = arith.constant 0 : index
    %c0_18 = arith.constant 0 : index
    %36 = vector.load %arg2[%35, %c0_17, %c0_18] : memref<3x128x128xbf16, #tpu.memory_space<vmem>>, vector<1x128x128xbf16>
    %37 = vector.shape_cast %36 : vector<1x128x128xbf16> to vector<128x128xbf16>
    %cst_19 = arith.constant dense<0.000000e+00> : vector<16x128xf32>
    %38 = tpu.matmul %34, %37, %cst_19 {dimension_numbers = #tpu.dot_dimension_numbers<[1], [0], [0], [1], [0, 0, 1, 1], [], []>} : vector<16x128xbf16>, vector<128x128xbf16>, vector<16x128xf32> -> vector<16x128xf32>
    %39 = arith.index_cast %c2_i32 : i32 to index
    %c0_20 = arith.constant 0 : index
    %c0_21 = arith.constant 0 : index
    %40 = vector.load %arg3[%39, %c0_20, %c0_21] : memref<3x1x128xf32, #tpu.memory_space<vmem>>, vector<1x1x128xf32>
    %41 = vector.shape_cast %40 : vector<1x1x128xf32> to vector<1x128xf32>
    %42 = vector.broadcast %41 : vector<1x128xf32> to vector<16x128xf32>
    %43 = arith.addf %38, %42 : vector<16x128xf32>
    %cst_22 = arith.constant 0.000000e+00 : f32
    %44 = vector.broadcast %cst_22 : f32 to vector<16x128xf32>
    %45 = arith.maximumf %43, %44 : vector<16x128xf32>
    %46 = arith.addf %45, %31 : vector<16x128xf32>
    %47 = arith.truncf %46 : vector<16x128xf32> to vector<16x128xbf16>
    %c3_i32 = arith.constant 3 : i32
    %48 = arith.mulf %46, %46 : vector<16x128xf32>
    %cst_23 = arith.constant dense<0.000000e+00> : vector<16xf32>
    %49 = vector.multi_reduction <add>, %48, %cst_23 [1] : vector<16x128xf32> to vector<16xf32>
    %50 = vector.shape_cast %49 : vector<16xf32> to vector<16x1xf32>
    %cst_24 = arith.constant 1.000000e-24 : f32
    %51 = vector.broadcast %cst_24 : f32 to vector<16x1xf32>
    %52 = arith.maximumf %50, %51 : vector<16x1xf32>
    %53 = math.rsqrt %52 : vector<16x1xf32>
    %54 = vector.broadcast %53 : vector<16x1xf32> to vector<16x128xf32>
    %55 = arith.mulf %46, %54 : vector<16x128xf32>
    %c0_25 = arith.constant 0 : index
    %c0_26 = arith.constant 0 : index
    %56 = vector.load %arg4[%c0_25, %c0_26] : memref<16x128xf32, #tpu.memory_space<vmem>>, vector<16x128xf32>
    tpu.vector_store %arg4[%c0_25, %c0_26], %55 {strides = array<i32>} : memref<16x128xf32, #tpu.memory_space<vmem>>, vector<16x128xf32>,
    return
  }
}

</mosaic_0001>

<llo_original>
// kernel: forward.1
$region0: #{forward.1}
  #allocation0 [shape = 'u32[]', space=smem, size = 0x4, offset = 0x4, fixed_abs, tag = 'smem constant byte address 0x4 - core index']
  #allocation1 [shape = 'u32[72,128]{1,0:T(1,128)}', space=vmem, size = 0x9000, scoped, tag = 'internal scratch']
  %s0 = inlined_call_operand.vmem [shape: bf16[16,16], index: 0, kind: input, shape index: {}]
  %s1 = inlined_call_operand.vmem [shape: f32[16,128], index: 1, kind: input, shape index: {}, may-alias: {1,4}]
  %s2 = inlined_call_operand.vmem [shape: bf16[3,128,128], index: 2, kind: input, shape index: {}]
  %s3 = inlined_call_operand.vmem [shape: f32[3,1,128], index: 3, kind: input, shape index: {}]
  %s4 = inlined_call_operand.vmem [shape: f32[16,128], index: 4, kind: output, shape index: {}, may-alias: {1,4}]
  %s5 = sld [smem:[#allocation0]]
  $region26: #{forward.1} parent=0
    _
  %s7 = ssub.s32 1, %s5
  %s8 = scalar_select 0, %s7, %s5
  // Predicated region
  $region2: #{forward.1} parent=0 // pred_check
    _
  $region3: #{forward.1} parent=0 // pred_check_branch
    %10 = sbr.rel (0) target = $region5
  $region4: #{forward.1} parent=0 // pred_region
    _
  $region5: #{forward.1} parent=0 // pred_fallthru
    _
  // Predicated region
  $region6: #{forward.1} parent=0 // pred_check
    _
  $region7: #{forward.1} parent=0 // pred_check_branch
    %12 = sbr.rel (0) target = $region9
  $region8: #{forward.1} parent=0 // pred_region
    _
  $region9: #{forward.1} parent=0 // pred_fallthru
    _
  // Predicated region
  $region10: #{forward.1} parent=0 // pred_check
    _
  $region11: #{forward.1} parent=0 // pred_check_branch
    %14 = sbr.rel (0) target = $region13
  $region12: #{forward.1} parent=0 // pred_region
    _
  $region13: #{forward.1} parent=0 // pred_fallthru
    _
  // Predicated region
  $region14: #{forward.1} parent=0 // pred_check
    _
  $region15: #{forward.1} parent=0 // pred_check_branch
    %16 = sbr.rel (0) target = $region17
  $region16: #{forward.1} parent=0 // pred_region
    _
  $region17: #{forward.1} parent=0 // pred_fallthru
    _
  %v18 = vld [vmem:[%s0] sm:$0xf]
  %v19 = vld [vmem:[%s0 + $0x4] sm:$0xf]
  %v20 = vld [vmem:[%s1] sm:$0xff]
  %v21 = vld [vmem:[%s1 + $0x8] sm:$0xff]
  %v22 = vpack.c.bf16 %v21, %v20
  %v25 = vunpack.c.l.b16 %v18
  %v26 = vunpack.c.l.b16 %v19
  %v27 = vpack.c.b16 %v26, %v25
  %vm28 = vcmask 130048
  %v30 = vsel %vm28, %v27, 0
  %32 = vmatpush.bf16.msra.mxu0 0
  %33 = vmatpush.bf16.msra.mxu0 0
  %34 = vmatpush.bf16.msra.mxu0 0
  %35 = vmatpush.bf16.msra.mxu0 0
  %36 = vmatpush.bf16.msra.mxu0 0
  %37 = vmatpush.bf16.msra.mxu0 0
  %38 = vmatpush.bf16.msra.mxu0 0
  %39 = vmatpush.bf16.msra.mxu0 %v22
  %40 = vmatmul.bf16.gmra.mxu0 %v30
  %v41 = vpop.f32.mrf.mxu0
  %v42 = vadd.f32 0.0, %v41
  %v43 = vpop.f32.mrf.mxu0
  %v44 = vadd.f32 0.0, %v43
  %45 = vdwg.mxu0
  %v46 = vpack.c.bf16 %v44, %v42
  %v47 = vld [vmem:[%s2] sm:$0xf]
  %v48 = vld [vmem:[%s2 + $0x4] sm:$0xf]
  %v49 = vld [vmem:[%s2 + $0x8] sm:$0xf]
  %v50 = vld [vmem:[%s2 + $0xc] sm:$0xf]
  %v51 = vld [vmem:[%s2 + $0x10] sm:$0xf]
  %v52 = vld [vmem:[%s2 + $0x14] sm:$0xf]
  %v53 = vld [vmem:[%s2 + $0x18] sm:$0xf]
  %v54 = vld [vmem:[%s2 + $0x1c] sm:$0xf]
  %v55 = vld [vmem:[%s2 + $0x20] sm:$0xf]
  %v56 = vld [vmem:[%s2 + $0x24] sm:$0xf]
  %v57 = vld [vmem:[%s2 + $0x28] sm:$0xf]
  %v58 = vld [vmem:[%s2 + $0x2c] sm:$0xf]
  %v59 = vld [vmem:[%s2 + $0x30] sm:$0xf]
  %v60 = vld [vmem:[%s2 + $0x34] sm:$0xf]
  %v61 = vld [vmem:[%s2 + $0x38] sm:$0xf]
  %v62 = vld [vmem:[%s2 + $0x3c] sm:$0xf]
  %v63 = vld [vmem:[%s3] sm:$0x1]
  %v65 = vperm.slane %v63, 0
  %v83 = vunpack.c.l.b16 %v47
  %v84 = vunpack.c.l.b16 %v48
  %v85 = vunpack.c.l.b16 %v49
  %v86 = vunpack.c.l.b16 %v50
  %v87 = vunpack.c.l.b16 %v51
  %v88 = vunpack.c.l.b16 %v52
  %v89 = vunpack.c.l.b16 %v53
  %v90 = vunpack.c.l.b16 %v54
  %v91 = vunpack.c.l.b16 %v55
  %v92 = vunpack.c.l.b16 %v56
  %v93 = vunpack.c.l.b16 %v57
  %v94 = vunpack.c.l.b16 %v58
  %v95 = vunpack.c.l.b16 %v59
  %v96 = vunpack.c.l.b16 %v60
  %v97 = vunpack.c.l.b16 %v61
  %v98 = vunpack.c.l.b16 %v62
  %v99 = vpack.c.b16 %v84, %v83
  %v100 = vpack.c.b16 %v86, %v85
  %v101 = vpack.c.b16 %v88, %v87
  %v102 = vpack.c.b16 %v90, %v89
  %v103 = vpack.c.b16 %v92, %v91
  %v104 = vpack.c.b16 %v94, %v93
  %v105 = vpack.c.b16 %v96, %v95
  %v106 = vpack.c.b16 %v98, %v97
  %115 = vmatpush.bf16.msra.mxu0 %v106
  %116 = vmatpush.bf16.msra.mxu0 %v105
  %117 = vmatpush.bf16.msra.mxu0 %v104
  %118 = vmatpush.bf16.msra.mxu0 %v103
  %119 = vmatpush.bf16.msra.mxu0 %v102
  %120 = vmatpush.bf16.msra.mxu0 %v101
  %121 = vmatpush.bf16.msra.mxu0 %v100
  %122 = vmatpush.bf16.msra.mxu0 %v99
  %123 = vmatmul.bf16.gmra.mxu0 %v46
  %v124 = vpop.f32.mrf.mxu0
  %v125 = vadd.f32 %v65, %v124
  %v126 = vpop.f32.mrf.mxu0
  %v127 = vadd.f32 %v65, %v126
  %128 = vdwg.mxu0
  %v129 = vmax.f32 %v125, 0.0
  %v130 = vmax.f32 %v127, 0.0
  %v131 = vadd.f32 %v129, %v20
  %v132 = vadd.f32 %v130, %v21
  %v133 = vpack.c.bf16 %v132, %v131
  %134 = vmatpush.bf16.msra.mxu0 0
  %135 = vmatpush.bf16.msra.mxu0 0
  %136 = vmatpush.bf16.msra.mxu0 0
  %137 = vmatpush.bf16.msra.mxu0 0
  %138 = vmatpush.bf16.msra.mxu0 0
  %139 = vmatpush.bf16.msra.mxu0 0
  %140 = vmatpush.bf16.msra.mxu0 0
  %141 = vmatpush.bf16.msra.mxu0 %v133
  %142 = vmatmul.bf16.gmra.mxu0 %v30
  %v143 = vpop.f32.mrf.mxu0
  %v144 = vadd.f32 0.0, %v143
  %v145 = vpop.f32.mrf.mxu0
  %v146 = vadd.f32 0.0, %v145
  %147 = vdwg.mxu0
  %v148 = vpack.c.bf16 %v146, %v144
  %s149 = scalar_lea.vmem %s2, 64
  %v150 = vld [vmem:[%s149] sm:$0xf]
  %v151 = vld [vmem:[%s149 + $0x4] sm:$0xf]
  %v152 = vld [vmem:[%s149 + $0x8] sm:$0xf]
  %v153 = vld [vmem:[%s149 + $0xc] sm:$0xf]
  %v154 = vld [vmem:[%s149 + $0x10] sm:$0xf]
  %v155 = vld [vmem:[%s149 + $0x14] sm:$0xf]
  %v156 = vld [vmem:[%s149 + $0x18] sm:$0xf]
  %v157 = vld [vmem:[%s149 + $0x1c] sm:$0xf]
  %v158 = vld [vmem:[%s149 + $0x20] sm:$0xf]
  %v159 = vld [vmem:[%s149 + $0x24] sm:$0xf]
  %v160 = vld [vmem:[%s149 + $0x28] sm:$0xf]
  %v161 = vld [vmem:[%s149 + $0x2c] sm:$0xf]
  %v162 = vld [vmem:[%s149 + $0x30] sm:$0xf]
  %v163 = vld [vmem:[%s149 + $0x34] sm:$0xf]
  %v164 = vld [vmem:[%s149 + $0x38] sm:$0xf]
  %v165 = vld [vmem:[%s149 + $0x3c] sm:$0xf]
  %s166 = scalar_lea.vmem %s3, 1
  %v167 = vld [vmem:[%s166] sm:$0x1]
  %v169 = vperm.slane %v167, 0
  %v187 = vunpack.c.l.b16 %v150
  %v188 = vunpack.c.l.b16 %v151
  %v189 = vunpack.c.l.b16 %v152
  %v190 = vunpack.c.l.b16 %v153
  %v191 = vunpack.c.l.b16 %v154
  %v192 = vunpack.c.l.b16 %v155
  %v193 = vunpack.c.l.b16 %v156
  %v194 = vunpack.c.l.b16 %v157
  %v195 = vunpack.c.l.b16 %v158
  %v196 = vunpack.c.l.b16 %v159
  %v197 = vunpack.c.l.b16 %v160
  %v198 = vunpack.c.l.b16 %v161
  %v199 = vunpack.c.l.b16 %v162
  %v200 = vunpack.c.l.b16 %v163
  %v201 = vunpack.c.l.b16 %v164
  %v202 = vunpack.c.l.b16 %v165
  %v203 = vpack.c.b16 %v188, %v187
  %v204 = vpack.c.b16 %v190, %v189
  %v205 = vpack.c.b16 %v192, %v191
  %v206 = vpack.c.b16 %v194, %v193
  %v207 = vpack.c.b16 %v196, %v195
  %v208 = vpack.c.b16 %v198, %v197
  %v209 = vpack.c.b16 %v200, %v199
  %v210 = vpack.c.b16 %v202, %v201
  %219 = vmatpush.bf16.msra.mxu0 %v210
  %220 = vmatpush.bf16.msra.mxu0 %v209
  %221 = vmatpush.bf16.msra.mxu0 %v208
  %222 = vmatpush.bf16.msra.mxu0 %v207
  %223 = vmatpush.bf16.msra.mxu0 %v206
  %224 = vmatpush.bf16.msra.mxu0 %v205
  %225 = vmatpush.bf16.msra.mxu0 %v204
  %226 = vmatpush.bf16.msra.mxu0 %v203
  %227 = vmatmul.bf16.gmra.mxu0 %v148
  %v228 = vpop.f32.mrf.mxu0
  %v229 = vadd.f32 %v169, %v228
  %v230 = vpop.f32.mrf.mxu0
  %v231 = vadd.f32 %v169, %v230
  %232 = vdwg.mxu0
  %v233 = vmax.f32 %v229, 0.0
  %v234 = vmax.f32 %v231, 0.0
  %v235 = vadd.f32 %v233, %v131
  %v236 = vadd.f32 %v234, %v132
  %v237 = vpack.c.bf16 %v236, %v235
  %238 = vmatpush.bf16.msra.mxu0 0
  %239 = vmatpush.bf16.msra.mxu0 0
  %240 = vmatpush.bf16.msra.mxu0 0
  %241 = vmatpush.bf16.msra.mxu0 0
  %242 = vmatpush.bf16.msra.mxu0 0
  %243 = vmatpush.bf16.msra.mxu0 0
  %244 = vmatpush.bf16.msra.mxu0 0
  %245 = vmatpush.bf16.msra.mxu0 %v237
  %246 = vmatmul.bf16.gmra.mxu0 %v30
  %v247 = vpop.f32.mrf.mxu0
  %v248 = vadd.f32 0.0, %v247
  %v249 = vpop.f32.mrf.mxu0
  %v250 = vadd.f32 0.0, %v249
  %251 = vdwg.mxu0
  %v252 = vpack.c.bf16 %v250, %v248
  %s253 = scalar_lea.vmem %s2, 128
  %v254 = vld [vmem:[%s253] sm:$0xf]
  %v255 = vld [vmem:[%s253 + $0x4] sm:$0xf]
  %v256 = vld [vmem:[%s253 + $0x8] sm:$0xf]
  %v257 = vld [vmem:[%s253 + $0xc] sm:$0xf]
  %v258 = vld [vmem:[%s253 + $0x10] sm:$0xf]
  %v259 = vld [vmem:[%s253 + $0x14] sm:$0xf]
  %v260 = vld [vmem:[%s253 + $0x18] sm:$0xf]
  %v261 = vld [vmem:[%s253 + $0x1c] sm:$0xf]
  %v262 = vld [vmem:[%s253 + $0x20] sm:$0xf]
  %v263 = vld [vmem:[%s253 + $0x24] sm:$0xf]
  %v264 = vld [vmem:[%s253 + $0x28] sm:$0xf]
  %v265 = vld [vmem:[%s253 + $0x2c] sm:$0xf]
  %v266 = vld [vmem:[%s253 + $0x30] sm:$0xf]
  %v267 = vld [vmem:[%s253 + $0x34] sm:$0xf]
  %v268 = vld [vmem:[%s253 + $0x38] sm:$0xf]
  %v269 = vld [vmem:[%s253 + $0x3c] sm:$0xf]
  %s270 = scalar_lea.vmem %s3, 2
  %v271 = vld [vmem:[%s270] sm:$0x1]
  %v273 = vperm.slane %v271, 0
  %v291 = vunpack.c.l.b16 %v254
  %v292 = vunpack.c.l.b16 %v255
  %v293 = vunpack.c.l.b16 %v256
  %v294 = vunpack.c.l.b16 %v257
  %v295 = vunpack.c.l.b16 %v258
  %v296 = vunpack.c.l.b16 %v259
  %v297 = vunpack.c.l.b16 %v260
  %v298 = vunpack.c.l.b16 %v261
  %v299 = vunpack.c.l.b16 %v262
  %v300 = vunpack.c.l.b16 %v263
  %v301 = vunpack.c.l.b16 %v264
  %v302 = vunpack.c.l.b16 %v265
  %v303 = vunpack.c.l.b16 %v266
  %v304 = vunpack.c.l.b16 %v267
  %v305 = vunpack.c.l.b16 %v268
  %v306 = vunpack.c.l.b16 %v269
  %v307 = vpack.c.b16 %v292, %v291
  %v308 = vpack.c.b16 %v294, %v293
  %v309 = vpack.c.b16 %v296, %v295
  %v310 = vpack.c.b16 %v298, %v297
  %v311 = vpack.c.b16 %v300, %v299
  %v312 = vpack.c.b16 %v302, %v301
  %v313 = vpack.c.b16 %v304, %v303
  %v314 = vpack.c.b16 %v306, %v305
  %323 = vmatpush.bf16.msra.mxu0 %v314
  %324 = vmatpush.bf16.msra.mxu0 %v313
  %325 = vmatpush.bf16.msra.mxu0 %v312
  %326 = vmatpush.bf16.msra.mxu0 %v311
  %327 = vmatpush.bf16.msra.mxu0 %v310
  %328 = vmatpush.bf16.msra.mxu0 %v309
  %329 = vmatpush.bf16.msra.mxu0 %v308
  %330 = vmatpush.bf16.msra.mxu0 %v307
  %331 = vmatmul.bf16.gmra.mxu0 %v252
  %v332 = vpop.f32.mrf.mxu0
  %v333 = vadd.f32 %v273, %v332
  %v334 = vpop.f32.mrf.mxu0
  %v335 = vadd.f32 %v273, %v334
  %336 = vdwg.mxu0
  %v337 = vmax.f32 %v333, 0.0
  %v338 = vmax.f32 %v335, 0.0
  %v339 = vadd.f32 %v337, %v235
  %v340 = vadd.f32 %v338, %v236
  %v341 = vmul.f32 %v339, %v339
  %v342 = vmul.f32 %v340, %v340
  %343 = vadd.xlane.f32.xlu0 %v341
  %v344 = vpop.xlane.xlu0 %343
  %345 = vadd.xlane.f32.xlu0 %v342
  %v346 = vpop.xlane.xlu0 %345
  %v347 = vmax.f32 %v344, 1e-24
  %v348 = vmax.f32 %v346, 1e-24
  %v349 = vrsqrt.pop %v347
  %v350 = vmul.f32 %v349, %v347
  %v351 = vmul.f32 %v350, %v349
  %v352 = vmul.f32 0.5, %v351
  %v353 = vsub.f32 1.5, %v352
  %v354 = vmul.f32 %v349, %v353
  %vm355 = vweird.f32 %v347
  %vm356 = vweird.f32 %v349
  %vm357 = vmor %vm355, %vm356
  %v358 = vsel %vm357, %v349, %v354
  %v359 = vrsqrt.pop %v348
  %v360 = vmul.f32 %v359, %v348
  %v361 = vmul.f32 %v360, %v359
  %v362 = vmul.f32 0.5, %v361
  %v363 = vsub.f32 1.5, %v362
  %v364 = vmul.f32 %v359, %v363
  %vm365 = vweird.f32 %v348
  %vm366 = vweird.f32 %v359
  %vm367 = vmor %vm365, %vm366
  %v368 = vsel %vm367, %v359, %v364
  %v369 = vmul.f32 %v339, %v358
  %v370 = vmul.f32 %v340, %v368
  %371 = vst [vmem:[%s4] sm:$0xff] %v369
  %372 = vst [vmem:[%s4 + $0x8] sm:$0xff] %v370
  // Predicated region
  $region18: #{forward.1} parent=0 // pred_check
    _
  $region19: #{forward.1} parent=0 // pred_check_branch
    %374 = sbr.rel (0) target = $region21
  $region20: #{forward.1} parent=0 // pred_region
    _
  $region21: #{forward.1} parent=0 // pred_fallthru
    _
  // Predicated region
  $region22: #{forward.1} parent=0 // pred_check
    _
  $region23: #{forward.1} parent=0 // pred_check_branch
    %376 = sbr.rel (0) target = $region25
  $region24: #{forward.1} parent=0 // pred_region
    _
  $region25: #{forward.1} parent=0 // pred_fallthru
    _

</llo_original>
